<compile_context>
chip_gen: v5e
topology: v5e:2x2
jax: 0.10.0
libtpu: 0.0.40
codegen_flags: <defaults>
</compile_context>

<pallas_src>
import jax
import jax.numpy as jnp
from jax.experimental import pallas as pl
from jax.experimental.pallas import tpu as pltpu


def _round_up(x: int, m: int) -> int:
    return ((x + m - 1) // m) * m


def _pick_batch_tile(B: int, batch_tile: int) -> int:
    """Minimize batch padding; prefer >=2 grid steps so v7x's 2 TCs get work."""
    n_tiles = pl.cdiv(B, batch_tile)
    if n_tiles < 2 and B >= 16:
        n_tiles = 2
    return _round_up(pl.cdiv(B, n_tiles), 8)


def _ensemble_kernel(x_ref, w_ref, b_ref, o_ref):
    # x block: (TB, D_in) f32 -> bf16 for the MXU (in-kernel cast avoids a
    # wrapper-side HBM round trip on x).  Weight is already bf16; accumulate
    # in f32 on the MXU, add the f32 bias, store f32.
    x_bf = x_ref[...].astype(jnp.bfloat16)
    acc = jnp.dot(x_bf, w_ref[...], preferred_element_type=jnp.float32)
    o_ref[...] = (acc + b_ref[...]).astype(o_ref.dtype)


def ensemble_forward(x, weights, biases, *, batch_tile=512):
    """Ensemble of Linear layers: y = sum_m (x @ W_m + b_m).

    x:       (B, D_in)        float32
    weights: (M, D_in, D_out) float32  (already transposed vs torch Linear)
    biases:  (M, 1, D_out)    float32
    returns: (B, D_out)       float32
    """
    B, D_in = x.shape
    M, _, D_out = weights.shape
    assert weights.shape == (M, D_in, D_out)
    assert biases.shape == (M, 1, D_out)

    # Fold the ensemble sum into the parameters once, in f32 (linearity of
    # Linear).  Cast only the weight to bf16 for the MXU; the bias stays f32
    # because it is added after the f32 accumulation.
    w_sum = jnp.sum(weights.astype(jnp.float32), axis=0).astype(jnp.bfloat16)
    b_sum = jnp.sum(biases.astype(jnp.float32), axis=0)  # (1, D_out) f32

    TB = _pick_batch_tile(B, batch_tile)
    grid = (pl.cdiv(B, TB),)  # batch tiles only; no reduction axis

    cost = pl.CostEstimate(
        flops=2 * B * D_in * D_out,
        transcendentals=0,
        bytes_accessed=(B * D_in * 4            # x (f32 read)
                        + D_in * D_out * 2      # summed weight (bf16 read)
                        + D_out * 4             # summed bias (f32 read)
                        + B * D_out * 4),       # output (f32 write)
    )

    def build(single_buffer_consts: bool):
        # Grid-invariant blocks (constant index_map): single-buffer them.
        const_kwargs = (
            dict(pipeline_mode=pl.Buffered(1)) if single_buffer_consts else {}
        )
        return pl.pallas_call(
            _ensemble_kernel,
            out_shape=jax.ShapeDtypeStruct((B, D_out), jnp.float32),
            grid_spec=pltpu.PrefetchScalarGridSpec(
                num_scalar_prefetch=0,
                grid=grid,
                in_specs=[
                    # x: one batch tile per grid step (full K in one block)
                    pl.BlockSpec((TB, D_in), lambda i: (i, 0)),
                    # summed weight: one constant block
                    pl.BlockSpec((D_in, D_out), lambda i: (0, 0), **const_kwargs),
                    # summed bias: one constant block
                    pl.BlockSpec((1, D_out), lambda i: (0, 0), **const_kwargs),
                ],
                out_specs=pl.BlockSpec((TB, D_out), lambda i: (i, 0)),
            ),
            compiler_params=pltpu.CompilerParams(
                # batch-tile axis is independent -> megacore/v7x can shard it
                dimension_semantics=("parallel",),
            ),
            cost_estimate=cost,
        )

    try:
        return build(single_buffer_consts=True)(x, w_sum, b_sum)
    except Exception:
        # Fallback if this Pallas build rejects pipeline_mode=pl.Buffered(1)
        # for the constant blocks: use the default (double-buffered) pipeline.
        return build(single_buffer_consts=False)(x, w_sum, b_sum)


if __name__ == "__main__":
    # Small, deterministic setup: ensemble of 3 Linear(32 -> 32) models.
    key = jax.random.PRNGKey(0)
    k_x, k_w, k_b = jax.random.split(key, 3)

    B, D_in, D_out, M = 8, 32, 32, 3

    x = jax.random.normal(k_x, (B, D_in), dtype=jnp.float32)
    # Deterministic "parameter init" (stand-in for each nn.Linear's weights).
    weights = jax.random.normal(k_w, (M, D_in, D_out), dtype=jnp.float32) * 0.1
    biases = jax.random.normal(k_b, (M, 1, D_out), dtype=jnp.float32) * 0.1

    y = ensemble_forward(x, weights, biases)
    jax.block_until_ready(y)

    # Pure-JAX f32 reference: y_ref = sum_m (x @ W_m + b_m).
    # Tolerance reflects bf16 MXU operands (f32 accumulation).
    y_ref = jnp.einsum("bi,mio->bo", x, weights) + jnp.sum(biases, axis=0)
    assert y.shape == y_ref.shape
    assert jnp.allclose(y, y_ref, atol=5e-2, rtol=5e-2), "mismatch vs reference"

    print("KERNEL_OK")
</pallas_src>

<mosaic_0001>
module attributes {stable_mosaic.version = 11 : i64} {
  func.func @_ensemble_kernel(%arg0: i32, %arg1: memref<8x32xf32, #tpu.memory_space<vmem>>, %arg2: memref<32x32xbf16, #tpu.memory_space<vmem>>, %arg3: memref<1x32xf32, #tpu.memory_space<vmem>>, %arg4: memref<8x32xf32, #tpu.memory_space<vmem>>) attributes {dimension_semantics = [#tpu.dimension_semantics<parallel>], iteration_bounds = array<i64: 1>, scalar_prefetch = 0 : i64, scratch_operands = 0 : i64, tpu.core_type = #tpu.core_type<tc>, window_params = [{transform_indices = @transform_0, window_bounds = array<i64: 8, 32>}, {pipeline_mode = #tpu.pipeline_mode<synchronous>, transform_indices = @transform_1, window_bounds = array<i64: 32, 32>}, {pipeline_mode = #tpu.pipeline_mode<synchronous>, transform_indices = @transform_2, window_bounds = array<i64: 1, 32>}, {transform_indices = @transform_3, window_bounds = array<i64: 8, 32>}]} {
    %c0 = arith.constant 0 : index
    %c0_0 = arith.constant 0 : index
    %0 = vector.load %arg1[%c0, %c0_0] : memref<8x32xf32, #tpu.memory_space<vmem>>, vector<8x32xf32>
    %1 = arith.truncf %0 : vector<8x32xf32> to vector<8x32xbf16>
    %c0_1 = arith.constant 0 : index
    %c0_2 = arith.constant 0 : index
    %2 = vector.load %arg2[%c0_1, %c0_2] : memref<32x32xbf16, #tpu.memory_space<vmem>>, vector<32x32xbf16>
    %cst = arith.constant dense<0.000000e+00> : vector<8x32xf32>
    %3 = tpu.matmul %1, %2, %cst {dimension_numbers = #tpu.dot_dimension_numbers<[1], [0], [0], [1], [0, 0, 1, 1], [], []>} : vector<8x32xbf16>, vector<32x32xbf16>, vector<8x32xf32> -> vector<8x32xf32>
    %c0_3 = arith.constant 0 : index
    %c0_4 = arith.constant 0 : index
    %4 = vector.load %arg3[%c0_3, %c0_4] : memref<1x32xf32, #tpu.memory_space<vmem>>, vector<1x32xf32>
    %5 = vector.broadcast %4 : vector<1x32xf32> to vector<8x32xf32>
    %6 = arith.addf %3, %5 : vector<8x32xf32>
    %c0_5 = arith.constant 0 : index
    %c0_6 = arith.constant 0 : index
    %7 = vector.load %arg4[%c0_5, %c0_6] : memref<8x32xf32, #tpu.memory_space<vmem>>, vector<8x32xf32>
    tpu.vector_store %arg4[%c0_5, %c0_6], %6 {strides = array<i32>} : memref<8x32xf32, #tpu.memory_space<vmem>>, vector<8x32xf32>,
    return
  }
  func.func @transform_0(%arg0: i32) -> (i32, i32) {
    %c0_i32 = arith.constant 0 : i32
    %c0_i32_0 = arith.constant 0 : i32
    return %arg0, %c0_i32 : i32, i32
  }
  func.func @transform_1(%arg0: i32) -> (i32, i32) {
    %c0_i32 = arith.constant 0 : i32
    %c0_i32_0 = arith.constant 0 : i32
    %c0_i32_1 = arith.constant 0 : i32
    return %c0_i32, %c0_i32_0 : i32, i32
  }
  func.func @transform_2(%arg0: i32) -> (i32, i32) {
    %c0_i32 = arith.constant 0 : i32
    %c0_i32_0 = arith.constant 0 : i32
    %c0_i32_1 = arith.constant 0 : i32
    return %c0_i32, %c0_i32_0 : i32, i32
  }
  func.func @transform_3(%arg0: i32) -> (i32, i32) {
    %c0_i32 = arith.constant 0 : i32
    %c0_i32_0 = arith.constant 0 : i32
    return %arg0, %c0_i32 : i32, i32
  }
}

module attributes {stable_mosaic.version = 11 : i64} {
  func.func @_ensemble_kernel(%arg0: i32, %arg1: memref<8x32xf32, #tpu.memory_space<vmem>>, %arg2: memref<32x32xbf16, #tpu.memory_space<vmem>>, %arg3: memref<1x32xf32, #tpu.memory_space<vmem>>, %arg4: memref<8x32xf32, #tpu.memory_space<vmem>>) attributes {dimension_semantics = [#tpu.dimension_semantics<parallel>], iteration_bounds = array<i64: 1>, scalar_prefetch = 0 : i64, scratch_operands = 0 : i64, tpu.core_type = #tpu.core_type<tc>, window_params = [{transform_indices = @transform_0, window_bounds = array<i64: 8, 32>}, {pipeline_mode = #tpu.pipeline_mode<synchronous>, transform_indices = @transform_1, window_bounds = array<i64: 32, 32>}, {pipeline_mode = #tpu.pipeline_mode<synchronous>, transform_indices = @transform_2, window_bounds = array<i64: 1, 32>}, {transform_indices = @transform_3, window_bounds = array<i64: 8, 32>}]} {
    %c0 = arith.constant 0 : index
    %c0_0 = arith.constant 0 : index
    %0 = vector.load %arg1[%c0, %c0_0] : memref<8x32xf32, #tpu.memory_space<vmem>>, vector<8x32xf32>
    %1 = arith.truncf %0 : vector<8x32xf32> to vector<8x32xbf16>
    %c0_1 = arith.constant 0 : index
    %c0_2 = arith.constant 0 : index
    %2 = vector.load %arg2[%c0_1, %c0_2] : memref<32x32xbf16, #tpu.memory_space<vmem>>, vector<32x32xbf16>
    %cst = arith.constant dense<0.000000e+00> : vector<8x32xf32>
    %3 = tpu.matmul %1, %2, %cst {dimension_numbers = #tpu.dot_dimension_numbers<[1], [0], [0], [1], [0, 0, 1, 1], [], []>} : vector<8x32xbf16>, vector<32x32xbf16>, vector<8x32xf32> -> vector<8x32xf32>
    %c0_3 = arith.constant 0 : index
    %c0_4 = arith.constant 0 : index
    %4 = vector.load %arg3[%c0_3, %c0_4] : memref<1x32xf32, #tpu.memory_space<vmem>>, vector<1x32xf32>
    %5 = vector.broadcast %4 : vector<1x32xf32> to vector<8x32xf32>
    %6 = arith.addf %3, %5 : vector<8x32xf32>
    %c0_5 = arith.constant 0 : index
    %c0_6 = arith.constant 0 : index
    %7 = vector.load %arg4[%c0_5, %c0_6] : memref<8x32xf32, #tpu.memory_space<vmem>>, vector<8x32xf32>
    tpu.vector_store %arg4[%c0_5, %c0_6], %6 {strides = array<i32>} : memref<8x32xf32, #tpu.memory_space<vmem>>, vector<8x32xf32>,
    return
  }
  func.func @transform_0(%arg0: i32) -> (i32, i32) {
    %c0_i32 = arith.constant 0 : i32
    %c0_i32_0 = arith.constant 0 : i32
    return %arg0, %c0_i32 : i32, i32
  }
  func.func @transform_1(%arg0: i32) -> (i32, i32) {
    %c0_i32 = arith.constant 0 : i32
    %c0_i32_0 = arith.constant 0 : i32
    %c0_i32_1 = arith.constant 0 : i32
    return %c0_i32, %c0_i32_0 : i32, i32
  }
  func.func @transform_2(%arg0: i32) -> (i32, i32) {
    %c0_i32 = arith.constant 0 : i32
    %c0_i32_0 = arith.constant 0 : i32
    %c0_i32_1 = arith.constant 0 : i32
    return %c0_i32, %c0_i32_0 : i32, i32
  }
  func.func @transform_3(%arg0: i32) -> (i32, i32) {
    %c0_i32 = arith.constant 0 : i32
    %c0_i32_0 = arith.constant 0 : i32
    return %arg0, %c0_i32 : i32, i32
  }
}

</mosaic_0001>

<llo_original>
// kernel: tpu_custom_call.1
$region0: #{tpu_custom_call.1}
  #allocation0 [shape = 'u32[]', space=smem, size = 0x4, offset = 0x4, fixed_abs, tag = 'smem constant byte address 0x4 - core index']
  #allocation1 [shape = 'u32[72,128]{1,0:T(1,128)}', space=vmem, size = 0x9000, scoped, tag = 'internal scratch']
  %s0 = inlined_call_operand.hbm [shape: f32[8,32], index: 0, kind: input, shape index: {}]
  %s1 = inlined_call_operand.hbm [shape: bf16[32,32], index: 1, kind: input, shape index: {}]
  %s2 = inlined_call_operand.vmem [shape: f32[1,32], index: 2, kind: input, shape index: {}]
  %s3 = inlined_call_operand.hbm [shape: f32[8,32], index: 3, kind: output, shape index: {}]
  %s4 = sld [smem:[#allocation0]]
  $region30: #{tpu_custom_call.1} parent=0
    _
  %s6 = ssub.s32 1, %s4
  %s7 = scalar_select 0, %s6, %s4
  $region1: #{tpu_custom_call.1} parent=0
    #allocation2 [shape = 'u8[4096]{0}', space=vmem, size = 0x1000, scoped, tag = 'input window, operand 0, single buffered']
    #allocation3 [shape = 's32[1]{0}', space=sflag, size = 0x4, scoped, tag = 'scoped memory for tpu_custom_call.1']
    #allocation4 [shape = 's32[1]{0}', space=sflag, size = 0x4, scoped, tag = 'scoped memory for tpu_custom_call.1']
    #allocation5 [shape = 'u8[8192]{0}', space=vmem, size = 0x2000, scoped, tag = 'input window, operand 1, single buffered']
    #allocation6 [shape = 's32[1]{0}', space=sflag, size = 0x4, scoped, tag = 'scoped memory for tpu_custom_call.1']
    #allocation7 [shape = 'u8[4096]{0}', space=vmem, size = 0x1000, scoped, tag = 'output window, operand 0, single buffered']
    %8 = vsyncpa [#allocation3], 0
    %9 = vsyncpa [#allocation6], 0
    %10 = vsyncpa [#allocation4], 0
    // Predicated region
    $region2: #{tpu_custom_call.1} parent=1 // pred_check
      _
    $region3: #{tpu_custom_call.1} parent=1 // pred_check_branch
      %12 = sbr.rel (0) target = $region5
    $region4: #{tpu_custom_call.1} parent=1 // pred_region
      %14 = vsyncadd [#allocation3], 0
      %s16 = sshll.u32 %s0, 4
      %s17 = int_to_ptr.hbm [resolvable:$true] %s16
      %s18 = sshll.u32 [#allocation2], 4
      %s19 = int_to_ptr.vmem [resolvable:$true] %s18
      %21 = dma.hbm_to_vmem [thread:$0]  %s17, 128, %s19, [#allocation3]
    $region5: #{tpu_custom_call.1} parent=1 // pred_fallthru
      _
    // Predicated region
    $region6: #{tpu_custom_call.1} parent=1 // pred_check
      _
    $region7: #{tpu_custom_call.1} parent=1 // pred_check_branch
      %23 = sbr.rel (0) target = $region9
    $region8: #{tpu_custom_call.1} parent=1 // pred_region
      %25 = vsyncadd [#allocation6], 0
      %s26 = sshll.u32 %s1, 4
      %s27 = int_to_ptr.hbm [resolvable:$true] %s26
      %s28 = sshll.u32 [#allocation5], 4
      %s29 = int_to_ptr.vmem [resolvable:$true] %s28
      %34 = dma.hbm_to_vmem [thread:$0]  %s27, 256, %s29, [#allocation6], 64, 64, 4
    $region9: #{tpu_custom_call.1} parent=1 // pred_fallthru
      _
    // Predicated region
    $region10: #{tpu_custom_call.1} parent=1 // pred_check
      _
    $region11: #{tpu_custom_call.1} parent=1 // pred_check_branch
      %36 = sbr.rel (0) target = $region13
    $region12: #{tpu_custom_call.1} parent=1 // pred_region
      _
    $region13: #{tpu_custom_call.1} parent=1 // pred_fallthru
      _
    // Predicated region
    $region14: #{tpu_custom_call.1} parent=1 // pred_check
      _
    $region15: #{tpu_custom_call.1} parent=1 // pred_check_branch
      %38 = sbr.rel (0) target = $region17
    $region16: #{tpu_custom_call.1} parent=1 // pred_region
      %40 = dma.done [#allocation3], 128
    $region17: #{tpu_custom_call.1} parent=1 // pred_fallthru
      _
    // Predicated region
    $region18: #{tpu_custom_call.1} parent=1 // pred_check
      _
    $region19: #{tpu_custom_call.1} parent=1 // pred_check_branch
      %42 = sbr.rel (0) target = $region21
    $region20: #{tpu_custom_call.1} parent=1 // pred_region
      %44 = dma.done [#allocation6], 256
    $region21: #{tpu_custom_call.1} parent=1 // pred_fallthru
      _
    %v46 = vld [vmem:[#allocation2] sm:$0xff]
    %v47 = vpack.c.bf16 %v46, %v46
    %v48 = vld [vmem:[#allocation5] sm:$0xf]
    %v49 = vld [vmem:[#allocation5 + $0x4] sm:$0xf]
    %v50 = vld [vmem:[#allocation5 + $0x8] sm:$0xf]
    %v51 = vld [vmem:[#allocation5 + $0xc] sm:$0xf]
    %v52 = vld [vmem:[%s2] sm:$0x1]
    %v54 = vperm.slane %v52, 0
    %v60 = vunpack.c.l.b16 %v48
    %v61 = vunpack.c.l.b16 %v49
    %v62 = vunpack.c.l.b16 %v50
    %v63 = vunpack.c.l.b16 %v51
    %v64 = vpack.c.b16 %v61, %v60
    %v65 = vpack.c.b16 %v63, %v62
    %vm68 = vcmask 261120
    %v70 = vsel %vm68, %v47, 0
    %72 = vmatpush.bf16.msra.mxu0 0
    %73 = vmatpush.bf16.msra.mxu0 0
    %74 = vmatpush.bf16.msra.mxu0 0
    %75 = vmatpush.bf16.msra.mxu0 0
    %76 = vmatpush.bf16.msra.mxu0 0
    %77 = vmatpush.bf16.msra.mxu0 0
    %78 = vmatpush.bf16.msra.mxu0 %v65
    %79 = vmatpush.bf16.msra.mxu0 %v64
    %80 = vmatmul.bf16.gmra.mxu0 %v70
    %v81 = vpop.f32.mrf.mxu0
    %v82 = vadd.f32 %v54, %v81
    %v83 = vpop.f32.mrf.mxu0
    %84 = vdwg.mxu0
    %85 = vst.msk [vmem:[#allocation7] sm:$0xff] %vm68, %v82
    // Predicated region
    $region22: #{tpu_custom_call.1} parent=1 // pred_check
      _
    $region23: #{tpu_custom_call.1} parent=1 // pred_check_branch
      %87 = sbr.rel (0) target = $region25
    $region24: #{tpu_custom_call.1} parent=1 // pred_region
      %89 = vsyncadd [#allocation4], 0
      %s91 = sshll.u32 [#allocation7], 4
      %s92 = int_to_ptr.vmem [resolvable:$true] %s91
      %s93 = sshll.u32 %s3, 4
      %s94 = int_to_ptr.hbm [resolvable:$true] %s93
      %96 = dma.vmem_to_hbm [thread:$0]  %s92, 128, %s94, [#allocation4]
    $region25: #{tpu_custom_call.1} parent=1 // pred_fallthru
      _
    // Predicated region
    $region26: #{tpu_custom_call.1} parent=1 // pred_check
      _
    $region27: #{tpu_custom_call.1} parent=1 // pred_check_branch
      %98 = sbr.rel (0) target = $region29
    $region28: #{tpu_custom_call.1} parent=1 // pred_region
      %100 = dma.done [#allocation4], 128
    $region29: #{tpu_custom_call.1} parent=1 // pred_fallthru
      _
    %101 = vsyncpa [#allocation3], 1
    %102 = vsyncpa [#allocation6], 1
    %103 = vsyncpa [#allocation4], 1

// kernel: tpu_custom_call.1
$region0: #{tpu_custom_call.1}
  #allocation0 [shape = 'u32[]', space=smem, size = 0x4, offset = 0x4, fixed_abs, tag = 'smem constant byte address 0x4 - core index']
  #allocation1 [shape = 'u32[72,128]{1,0:T(1,128)}', space=vmem, size = 0x9000, scoped, tag = 'internal scratch']
  %s0 = inlined_call_operand.hbm [shape: f32[8,32], index: 0, kind: input, shape index: {}]
  %s1 = inlined_call_operand.hbm [shape: bf16[32,32], index: 1, kind: input, shape index: {}]
  %s2 = inlined_call_operand.vmem [shape: f32[1,32], index: 2, kind: input, shape index: {}]
  %s3 = inlined_call_operand.hbm [shape: f32[8,32], index: 3, kind: output, shape index: {}]
  %s4 = sld [smem:[#allocation0]]
  $region30: #{tpu_custom_call.1} parent=0
    _
  %s6 = ssub.s32 1, %s4
  %s7 = scalar_select 0, %s6, %s4
  $region1: #{tpu_custom_call.1} parent=0
    #allocation2 [shape = 'u8[4096]{0}', space=vmem, size = 0x1000, scoped, tag = 'input window, operand 0, single buffered']
    #allocation3 [shape = 's32[1]{0}', space=sflag, size = 0x4, scoped, tag = 'scoped memory for tpu_custom_call.1']
    #allocation4 [shape = 's32[1]{0}', space=sflag, size = 0x4, scoped, tag = 'scoped memory for tpu_custom_call.1']
    #allocation5 [shape = 'u8[8192]{0}', space=vmem, size = 0x2000, scoped, tag = 'input window, operand 1, single buffered']
    #allocation6 [shape = 's32[1]{0}', space=sflag, size = 0x4, scoped, tag = 'scoped memory for tpu_custom_call.1']
    #allocation7 [shape = 'u8[4096]{0}', space=vmem, size = 0x1000, scoped, tag = 'output window, operand 0, single buffered']
    %8 = vsyncpa [#allocation3], 0
    %9 = vsyncpa [#allocation6], 0
    %10 = vsyncpa [#allocation4], 0
    // Predicated region
    $region2: #{tpu_custom_call.1} parent=1 // pred_check
      _
    $region3: #{tpu_custom_call.1} parent=1 // pred_check_branch
      %12 = sbr.rel (0) target = $region5
    $region4: #{tpu_custom_call.1} parent=1 // pred_region
      %14 = vsyncadd [#allocation3], 0
      %s16 = sshll.u32 %s0, 4
      %s17 = int_to_ptr.hbm [resolvable:$true] %s16
      %s18 = sshll.u32 [#allocation2], 4
      %s19 = int_to_ptr.vmem [resolvable:$true] %s18
      %21 = dma.hbm_to_vmem [thread:$0]  %s17, 128, %s19, [#allocation3]
    $region5: #{tpu_custom_call.1} parent=1 // pred_fallthru
      _
    // Predicated region
    $region6: #{tpu_custom_call.1} parent=1 // pred_check
      _
    $region7: #{tpu_custom_call.1} parent=1 // pred_check_branch
      %23 = sbr.rel (0) target = $region9
    $region8: #{tpu_custom_call.1} parent=1 // pred_region
      %25 = vsyncadd [#allocation6], 0
      %s26 = sshll.u32 %s1, 4
      %s27 = int_to_ptr.hbm [resolvable:$true] %s26
      %s28 = sshll.u32 [#allocation5], 4
      %s29 = int_to_ptr.vmem [resolvable:$true] %s28
      %34 = dma.hbm_to_vmem [thread:$0]  %s27, 256, %s29, [#allocation6], 64, 64, 4
    $region9: #{tpu_custom_call.1} parent=1 // pred_fallthru
      _
    // Predicated region
    $region10: #{tpu_custom_call.1} parent=1 // pred_check
      _
    $region11: #{tpu_custom_call.1} parent=1 // pred_check_branch
      %36 = sbr.rel (0) target = $region13
    $region12: #{tpu_custom_call.1} parent=1 // pred_region
      _
    $region13: #{tpu_custom_call.1} parent=1 // pred_fallthru
      _
    // Predicated region
    $region14: #{tpu_custom_call.1} parent=1 // pred_check
      _
    $region15: #{tpu_custom_call.1} parent=1 // pred_check_branch
      %38 = sbr.rel (0) target = $region17
    $region16: #{tpu_custom_call.1} parent=1 // pred_region
      %40 = dma.done [#allocation3], 128
    $region17: #{tpu_custom_call.1} parent=1 // pred_fallthru
      _
    // Predicated region
    $region18: #{tpu_custom_call.1} parent=1 // pred_check
      _
    $region19: #{tpu_custom_call.1} parent=1 // pred_check_branch
      %42 = sbr.rel (0) target = $region21
    $region20: #{tpu_custom_call.1} parent=1 // pred_region
      %44 = dma.done [#allocation6], 256
    $region21: #{tpu_custom_call.1} parent=1 // pred_fallthru
      _
    %v46 = vld [vmem:[#allocation2] sm:$0xff]
    %v47 = vpack.c.bf16 %v46, %v46
    %v48 = vld [vmem:[#allocation5] sm:$0xf]
    %v49 = vld [vmem:[#allocation5 + $0x4] sm:$0xf]
    %v50 = vld [vmem:[#allocation5 + $0x8] sm:$0xf]
    %v51 = vld [vmem:[#allocation5 + $0xc] sm:$0xf]
    %v52 = vld [vmem:[%s2] sm:$0x1]
    %v54 = vperm.slane %v52, 0
    %v60 = vunpack.c.l.b16 %v48
    %v61 = vunpack.c.l.b16 %v49
    %v62 = vunpack.c.l.b16 %v50
    %v63 = vunpack.c.l.b16 %v51
    %v64 = vpack.c.b16 %v61, %v60
    %v65 = vpack.c.b16 %v63, %v62
    %vm68 = vcmask 261120
    %v70 = vsel %vm68, %v47, 0
    %72 = vmatpush.bf16.msra.mxu0 0
    %73 = vmatpush.bf16.msra.mxu0 0
    %74 = vmatpush.bf16.msra.mxu0 0
    %75 = vmatpush.bf16.msra.mxu0 0
    %76 = vmatpush.bf16.msra.mxu0 0
    %77 = vmatpush.bf16.msra.mxu0 0
    %78 = vmatpush.bf16.msra.mxu0 %v65
    %79 = vmatpush.bf16.msra.mxu0 %v64
    %80 = vmatmul.bf16.gmra.mxu0 %v70
    %v81 = vpop.f32.mrf.mxu0
    %v82 = vadd.f32 %v54, %v81
    %v83 = vpop.f32.mrf.mxu0
    %84 = vdwg.mxu0
    %85 = vst.msk [vmem:[#allocation7] sm:$0xff] %vm68, %v82
    // Predicated region
    $region22: #{tpu_custom_call.1} parent=1 // pred_check
      _
    $region23: #{tpu_custom_call.1} parent=1 // pred_check_branch
      %87 = sbr.rel (0) target = $region25
    $region24: #{tpu_custom_call.1} parent=1 // pred_region
      %89 = vsyncadd [#allocation4], 0
      %s91 = sshll.u32 [#allocation7], 4
      %s92 = int_to_ptr.vmem [resolvable:$true] %s91
      %s93 = sshll.u32 %s3, 4
      %s94 = int_to_ptr.hbm [resolvable:$true] %s93
      %96 = dma.vmem_to_hbm [thread:$0]  %s92, 128, %s94, [#allocation4]
    $region25: #{tpu_custom_call.1} parent=1 // pred_fallthru
      _
    // Predicated region
    $region26: #{tpu_custom_call.1} parent=1 // pred_check
      _
    $region27: #{tpu_custom_call.1} parent=1 // pred_check_branch
      %98 = sbr.rel (0) target = $region29
    $region28: #{tpu_custom_call.1} parent=1 // pred_region
      %100 = dma.done [#allocation4], 128
    $region29: #{tpu_custom_call.1} parent=1 // pred_fallthru
      _
    %101 = vsyncpa [#allocation3], 1
    %102 = vsyncpa [#allocation6], 1
    %103 = vsyncpa [#allocation4], 1

</llo_original>
